<compile_context>
chip_gen: v7x
topology: tpu7x:2x2x1
jax: 0.10.0
libtpu: 0.0.40
codegen_flags: <defaults>
</compile_context>

<pallas_src>
import inspect

import jax
import jax.numpy as jnp
from jax.experimental import pallas as pl
from jax.experimental.pallas import tpu as pltpu


def feature_attention_kernel(x_ref, w1_ref, b1_ref, w2_ref, b2_ref, o_ref):
    """One batch-tile of FeatureAttention.

    h   = relu(x @ w1 + b1)
    att = sigmoid(h @ w2 + b2)
    out = x * att + x
    """
    x = x_ref[...]                                            # (bm, D), native dtype
    h = jnp.dot(x.astype(w1_ref.dtype), w1_ref[...],
                preferred_element_type=jnp.float32)           # (bm, H) f32 acc
    h = jnp.maximum(h + b1_ref[...], 0.0)                     # ReLU (b1 is f32)
    a = jnp.dot(h.astype(w2_ref.dtype), w2_ref[...],
                preferred_element_type=jnp.float32)           # (bm, D) f32 acc
    a = jax.nn.sigmoid(a + b2_ref[...])                       # Sigmoid (EUP, f32)
    xf = x.astype(jnp.float32)
    o_ref[...] = (xf * a + xf).astype(o_ref.dtype)            # x * att + x


def _round_up(n, m):
    return ((n + m - 1) // m) * m


def _vmem_budget_bytes():
    """Generation-aware scoped-VMEM budget (~half of physical VMEM)."""
    cap = None
    try:
        info = pltpu.get_tpu_info()
        cap = getattr(info, "vmem_capacity_bytes", None)
    except Exception:
        cap = None
    if not cap:
        cap = 64 * 1024 * 1024          # v7x-conservative fallback (64 MiB VMEM)
    return max(16 * 1024 * 1024, int(cap) // 2)


def _choose_bm(B, D, H, x_itemsize, w_itemsize, budget_bytes, requested=None):
    """Batch tile: largest sublane-aligned tile fitting the VMEM budget,
    capped so the batch grid has >= 2 parallel steps (v7x megacore)."""
    sub = 16 if x_itemsize < 4 else 8                 # sublane quantum for x/out tiles
    if B <= sub:
        return int(B)                                  # single full-dim block
    # Resident weights/biases; counted double-buffered to stay conservative
    # even when single-buffering (pl.Buffered(1)) is unavailable.
    weight_bytes = 2 * (2 * D * H * w_itemsize + (H + D) * 4)
    # Per batch row: x + out tiles (double-buffered, native dtype) + f32 temps.
    per_row = 4 * D * x_itemsize + (H + 3 * D) * 4
    avail = budget_bytes - weight_bytes
    if avail <= per_row * sub:
        cap = sub
    else:
        cap = max(sub, min(2048, (avail // per_row) // sub * sub))
    bm = cap if requested is None else min(_round_up(int(requested), sub), cap)
    if B >= 2 * sub:
        # Guarantee >= 2 grid steps so ("parallel",) can shard across both v7x TCs.
        bm = min(bm, _round_up(pl.cdiv(B, 2), sub))
    bm = max(sub, min(bm, _round_up(B, sub)))
    return int(bm)


def _supports_single_buffered_weights():
    if not hasattr(pl, "Buffered"):
        return False
    try:
        return "pipeline_mode" in inspect.signature(pl.BlockSpec).parameters
    except Exception:
        return False


def feature_attention(x, w1, b1, w2, b2, *, bm=None):
    """x: (B, D); w1: (D, H); b1: (H,)/(1,H); w2: (H, D); b2: (D,)/(1,D)."""
    B, D = x.shape
    Din, H = w1.shape
    assert Din == D, "w1 must be (in_dim, hidden)"

    # MXU compute dtype: bf16 inputs stay on the native bf16 MXU path.
    compute_dtype = jnp.bfloat16 if x.dtype == jnp.bfloat16 else jnp.float32
    w1c = w1.astype(compute_dtype)
    w2c = w2.astype(compute_dtype)
    b1c = jnp.reshape(b1, (1, H)).astype(jnp.float32)
    b2c = jnp.reshape(b2, (1, D)).astype(jnp.float32)

    x_itemsize = jnp.dtype(x.dtype).itemsize
    w_itemsize = jnp.dtype(compute_dtype).itemsize

    budget = _vmem_budget_bytes()
    bm = _choose_bm(B, D, H, x_itemsize, w_itemsize, budget, requested=bm)
    grid = (pl.cdiv(B, bm),)

    weight_mode = {}
    if _supports_single_buffered_weights():
        weight_mode = dict(pipeline_mode=pl.Buffered(1))   # constant index_map -> single buffer

    in_specs = [
        pl.BlockSpec((bm, D), lambda i: (i, 0)),                 # x: tiled over batch
        pl.BlockSpec((D, H), lambda i: (0, 0), **weight_mode),   # w1: VMEM-resident
        pl.BlockSpec((1, H), lambda i: (0, 0), **weight_mode),   # b1: VMEM-resident
        pl.BlockSpec((H, D), lambda i: (0, 0), **weight_mode),   # w2: VMEM-resident
        pl.BlockSpec((1, D), lambda i: (0, 0), **weight_mode),   # b2: VMEM-resident
    ]

    cost = pl.CostEstimate(
        flops=4 * B * D * H + 6 * B * D,
        transcendentals=B * D,                                    # sigmoid
        bytes_accessed=2 * B * D * x_itemsize + 2 * D * H * w_itemsize + (H + D) * 4,
    )

    return pl.pallas_call(
        feature_attention_kernel,
        out_shape=jax.ShapeDtypeStruct((B, D), x.dtype),
        grid_spec=pltpu.PrefetchScalarGridSpec(
            num_scalar_prefetch=0,
            grid=grid,
            in_specs=in_specs,
            out_specs=pl.BlockSpec((bm, D), lambda i: (i, 0)),
        ),
        compiler_params=pltpu.CompilerParams(
            dimension_semantics=("parallel",),
            vmem_limit_bytes=int(budget),
        ),
        cost_estimate=cost,
    )(x, w1c, b1c, w2c, b2c)


def feature_attention_ref(x, w1, b1, w2, b2):
    """Pure-JAX (f32) reference matching the PyTorch forward."""
    xf = x.astype(jnp.float32)
    h = jax.nn.relu(xf @ w1.astype(jnp.float32)
                    + jnp.reshape(b1, (1, -1)).astype(jnp.float32))
    a = jax.nn.sigmoid(h @ w2.astype(jnp.float32)
                       + jnp.reshape(b2, (1, -1)).astype(jnp.float32))
    return xf * a + xf


if __name__ == "__main__":
    key = jax.random.PRNGKey(0)

    def make_params(key, in_dim, hidden, dtype=jnp.float32):
        kw1, kb1, kw2, kb2 = jax.random.split(key, 4)
        bound1 = 1.0 / (in_dim ** 0.5)
        w1 = jax.random.uniform(kw1, (in_dim, hidden), jnp.float32, -bound1, bound1).astype(dtype)
        b1 = jax.random.uniform(kb1, (hidden,), jnp.float32, -bound1, bound1).astype(dtype)
        bound2 = 1.0 / (hidden ** 0.5)
        w2 = jax.random.uniform(kw2, (hidden, in_dim), jnp.float32, -bound2, bound2).astype(dtype)
        b2 = jax.random.uniform(kb2, (in_dim,), jnp.float32, -bound2, bound2).astype(dtype)
        return w1, b1, w2, b2

    # Case 1: the module's implied small shape (batch, in_dim, reduction=4), f32.
    k1, k2, k3, kx1, kx2, kx3 = jax.random.split(key, 6)
    batch, in_dim, reduction = 16, 64, 4
    hidden = in_dim // reduction
    x = jax.random.normal(kx1, (batch, in_dim), dtype=jnp.float32)
    w1, b1, w2, b2 = make_params(k1, in_dim, hidden)

    out = jax.block_until_ready(feature_attention(x, w1, b1, w2, b2))
    ref = feature_attention_ref(x, w1, b1, w2, b2)
    assert out.shape == (batch, in_dim)
    assert jnp.allclose(out, ref, atol=1e-5, rtol=1e-5), "mismatch vs reference (case 1)"

    # Case 2: ragged batch + multi-step grid with a user-supplied (clamped) bm.
    batch2, in_dim2, reduction2 = 40, 96, 4
    hidden2 = in_dim2 // reduction2
    x2 = jax.random.normal(kx2, (batch2, in_dim2), dtype=jnp.float32)
    w1b, b1b, w2b, b2b = make_params(k2, in_dim2, hidden2)

    out2 = jax.block_until_ready(feature_attention(x2, w1b, b1b, w2b, b2b, bm=16))
    ref2 = feature_attention_ref(x2, w1b, b1b, w2b, b2b)
    assert out2.shape == (batch2, in_dim2)
    assert jnp.allclose(out2, ref2, atol=1e-5, rtol=1e-5), "mismatch vs reference (case 2)"

    # Case 3: bf16 activations/weights -> native bf16 DMA + bf16 MXU matmuls.
    batch3, in_dim3, reduction3 = 32, 64, 4
    hidden3 = in_dim3 // reduction3
    x3 = jax.random.normal(kx3, (batch3, in_dim3), dtype=jnp.float32).astype(jnp.bfloat16)
    w1c_, b1c_, w2c_, b2c_ = make_params(k3, in_dim3, hidden3, dtype=jnp.bfloat16)

    out3 = jax.block_until_ready(feature_attention(x3, w1c_, b1c_, w2c_, b2c_))
    ref3 = feature_attention_ref(x3, w1c_, b1c_, w2c_, b2c_)
    assert out3.shape == (batch3, in_dim3)
    assert out3.dtype == jnp.bfloat16
    assert jnp.allclose(out3.astype(jnp.float32), ref3, atol=5e-2, rtol=5e-2), \
        "mismatch vs reference (case 3, bf16)"

    print("KERNEL_OK")
</pallas_src>

<mosaic_0001>
module attributes {stable_mosaic.version = 11 : i64} {
  func.func @feature_attention_kernel(%arg0: i32, %arg1: memref<8x64xf32, #tpu.memory_space<vmem>>, %arg2: memref<64x16xf32, #tpu.memory_space<vmem>>, %arg3: memref<1x16xf32, #tpu.memory_space<vmem>>, %arg4: memref<16x64xf32, #tpu.memory_space<vmem>>, %arg5: memref<1x64xf32, #tpu.memory_space<vmem>>, %arg6: memref<8x64xf32, #tpu.memory_space<vmem>>) attributes {dimension_semantics = [#tpu.dimension_semantics<parallel>], iteration_bounds = array<i64: 2>, scalar_prefetch = 0 : i64, scratch_operands = 0 : i64, tpu.core_type = #tpu.core_type<tc>, window_params = [{transform_indices = @transform_0, window_bounds = array<i64: 8, 64>}, {pipeline_mode = #tpu.pipeline_mode<synchronous>, transform_indices = @transform_1, window_bounds = array<i64: 64, 16>}, {pipeline_mode = #tpu.pipeline_mode<synchronous>, transform_indices = @transform_2, window_bounds = array<i64: 1, 16>}, {pipeline_mode = #tpu.pipeline_mode<synchronous>, transform_indices = @transform_3, window_bounds = array<i64: 16, 64>}, {pipeline_mode = #tpu.pipeline_mode<synchronous>, transform_indices = @transform_4, window_bounds = array<i64: 1, 64>}, {transform_indices = @transform_5, window_bounds = array<i64: 8, 64>}]} {
    %c0 = arith.constant 0 : index
    %c0_0 = arith.constant 0 : index
    %0 = vector.load %arg1[%c0, %c0_0] : memref<8x64xf32, #tpu.memory_space<vmem>>, vector<8x64xf32>
    %c0_1 = arith.constant 0 : index
    %c0_2 = arith.constant 0 : index
    %1 = vector.load %arg2[%c0_1, %c0_2] : memref<64x16xf32, #tpu.memory_space<vmem>>, vector<64x16xf32>
    %cst = arith.constant dense<0.000000e+00> : vector<8x16xf32>
    %2 = tpu.matmul %0, %1, %cst {dimension_numbers = #tpu.dot_dimension_numbers<[1], [0], [0], [1], [0, 0, 1, 1], [], []>} : vector<8x64xf32>, vector<64x16xf32>, vector<8x16xf32> -> vector<8x16xf32>
    %c0_3 = arith.constant 0 : index
    %c0_4 = arith.constant 0 : index
    %3 = vector.load %arg3[%c0_3, %c0_4] : memref<1x16xf32, #tpu.memory_space<vmem>>, vector<1x16xf32>
    %4 = vector.broadcast %3 : vector<1x16xf32> to vector<8x16xf32>
    %5 = arith.addf %2, %4 : vector<8x16xf32>
    %cst_5 = arith.constant 0.000000e+00 : f32
    %6 = vector.broadcast %cst_5 : f32 to vector<8x16xf32>
    %7 = arith.maximumf %5, %6 : vector<8x16xf32>
    %c0_6 = arith.constant 0 : index
    %c0_7 = arith.constant 0 : index
    %8 = vector.load %arg4[%c0_6, %c0_7] : memref<16x64xf32, #tpu.memory_space<vmem>>, vector<16x64xf32>
    %cst_8 = arith.constant dense<0.000000e+00> : vector<8x64xf32>
    %9 = tpu.matmul %7, %8, %cst_8 {dimension_numbers = #tpu.dot_dimension_numbers<[1], [0], [0], [1], [0, 0, 1, 1], [], []>} : vector<8x16xf32>, vector<16x64xf32>, vector<8x64xf32> -> vector<8x64xf32>
    %c0_9 = arith.constant 0 : index
    %c0_10 = arith.constant 0 : index
    %10 = vector.load %arg5[%c0_9, %c0_10] : memref<1x64xf32, #tpu.memory_space<vmem>>, vector<1x64xf32>
    %11 = vector.broadcast %10 : vector<1x64xf32> to vector<8x64xf32>
    %12 = arith.addf %9, %11 : vector<8x64xf32>
    %13 = arith.negf %12 : vector<8x64xf32>
    %14 = math.exp %13 : vector<8x64xf32>
    %cst_11 = arith.constant 1.000000e+00 : f32
    %15 = vector.broadcast %cst_11 : f32 to vector<8x64xf32>
    %16 = arith.addf %15, %14 : vector<8x64xf32>
    %17 = arith.divf %15, %16 : vector<8x64xf32>
    %18 = arith.mulf %0, %17 : vector<8x64xf32>
    %19 = arith.addf %18, %0 : vector<8x64xf32>
    %c0_12 = arith.constant 0 : index
    %c0_13 = arith.constant 0 : index
    %20 = vector.load %arg6[%c0_12, %c0_13] : memref<8x64xf32, #tpu.memory_space<vmem>>, vector<8x64xf32>
    tpu.vector_store %arg6[%c0_12, %c0_13], %19 {strides = array<i32>} : memref<8x64xf32, #tpu.memory_space<vmem>>, vector<8x64xf32>,
    return
  }
  func.func @transform_0(%arg0: i32) -> (i32, i32) {
    %c0_i32 = arith.constant 0 : i32
    %c0_i32_0 = arith.constant 0 : i32
    return %arg0, %c0_i32 : i32, i32
  }
  func.func @transform_1(%arg0: i32) -> (i32, i32) {
    %c0_i32 = arith.constant 0 : i32
    %c0_i32_0 = arith.constant 0 : i32
    %c0_i32_1 = arith.constant 0 : i32
    return %c0_i32, %c0_i32_0 : i32, i32
  }
  func.func @transform_2(%arg0: i32) -> (i32, i32) {
    %c0_i32 = arith.constant 0 : i32
    %c0_i32_0 = arith.constant 0 : i32
    %c0_i32_1 = arith.constant 0 : i32
    return %c0_i32, %c0_i32_0 : i32, i32
  }
  func.func @transform_3(%arg0: i32) -> (i32, i32) {
    %c0_i32 = arith.constant 0 : i32
    %c0_i32_0 = arith.constant 0 : i32
    %c0_i32_1 = arith.constant 0 : i32
    return %c0_i32, %c0_i32_0 : i32, i32
  }
  func.func @transform_4(%arg0: i32) -> (i32, i32) {
    %c0_i32 = arith.constant 0 : i32
    %c0_i32_0 = arith.constant 0 : i32
    %c0_i32_1 = arith.constant 0 : i32
    return %c0_i32, %c0_i32_0 : i32, i32
  }
  func.func @transform_5(%arg0: i32) -> (i32, i32) {
    %c0_i32 = arith.constant 0 : i32
    %c0_i32_0 = arith.constant 0 : i32
    return %arg0, %c0_i32 : i32, i32
  }
}

</mosaic_0001>

<llo_original>
// kernel: tpu_custom_call.1
$region0: #{tpu_custom_call.1}
  #allocation0 [shape = 'u32[]', space=smem, size = 0x4, offset = 0x4, fixed_abs, tag = 'smem constant byte address 0x4 - core index']
  #allocation1 [shape = 'u32[144,128]{1,0:T(1,128)}', space=vmem, size = 0x12000, scoped, tag = 'internal scratch']
  %s0 = inlined_call_operand.vmem [shape: f32[16,64], index: 0, kind: input, shape index: {}]
  %s1 = inlined_call_operand.vmem [shape: f32[64,16], index: 1, kind: input, shape index: {}]
  %s2 = inlined_call_operand.vmem [shape: f32[1,16], index: 2, kind: input, shape index: {}]
  %s3 = inlined_call_operand.vmem [shape: f32[16,64], index: 3, kind: input, shape index: {}]
  %s4 = inlined_call_operand.vmem [shape: f32[1,64], index: 4, kind: input, shape index: {}]
  %s5 = inlined_call_operand.hbm [shape: f32[16,64], index: 5, kind: output, shape index: {}]
  %s6 = sld [smem:[#allocation0]]
  $region53: #{tpu_custom_call.1} parent=0
    _
  %s8 = ssub.s32 1, %s6
  %s9 = scalar_select 0, %s8, %s6
  $region1: #{tpu_custom_call.1} parent=0
    #allocation2 [shape = 'u8[8192]{0}', space=vmem, size = 0x2000, scoped, tag = 'output window, operand 0']
    #allocation3 [shape = 's32[2]{0}', space=sflag, size = 0x8, scoped, tag = 'scoped memory for tpu_custom_call.1']
    %10 = vsyncpa [#allocation3], 0
    %s11 = scalar_lea.sflag [#allocation3], 1
    %12 = vsyncpa %s11, 0
    loop: start=0, step=1, limit=4
    $region2: #{tpu_custom_call.1} parent=1 // loop_pre_header
      _
    $region3: #{tpu_custom_call.1} parent=1 // loop_header
      %s14 = sphi 0, %s18
      %p15 = scmp.ge.s32.totalorder %s14, 4
      %s24 = sphi 0, %s26
      %s27 = sphi 0, %s24
      %s28 = sphi 0, %s27
      %s44 = sphi 0, %s28
      %s48 = sphi 0, %s48
      %s50 = sphi 0, %s48
      %s51 = sphi 0, %s50
      %s65 = sphi 0, %s51
      %s69 = sphi 0, %s69
      %s71 = sphi 0, %s69
      %s72 = sphi 0, %s71
      %s86 = sphi 0, %s72
      %s90 = sphi 0, %s90
      %s92 = sphi 0, %s90
      %s93 = sphi 0, %s92
      %s107 = sphi 0, %s93
      %s111 = sphi 0, %s111
      %s113 = sphi 0, %s111
      %s114 = sphi 0, %s113
      %s128 = sphi 0, %s114
      %s134 = sphi 0, %s136
      %s137 = sphi 0, %s134
      %s138 = sphi 0, %s137
      %s154 = sphi 0, %s138
    $region4: #{tpu_custom_call.1} parent=1 // loop_header_branch
      %17 = sbr.rel (%p15) target = $region8
    $region5: #{tpu_custom_call.1} parent=1 // loop_body
      %s19 = ssub.s32 %s14, 1
      %s20 = ssub.s32 %s14, 2
      %s21 = sadd.s32 %s14, 1
      %s22 = ssub.s32 %s14, %s21
      %p23 = scmp.eq.s32.totalorder %s22, 0
      %s25 = sadd.s32 %s24, 1
      %s26 = scalar_select %p23, %s24, %s25
      %p29 = pneg %p23
      %p30 = scmp.eq.s32.totalorder %s14, 1
      %p31 = por %p29, %p30
      %p32 = scmp.ne.s32.totalorder %s24, %s27
      %p33 = scmp.eq.s32.totalorder %s14, 0
      %p34 = por %p32, %p33
      %p35 = scmp.ne.s32.totalorder %s24, %s27
      %p36 = scmp.eq.s32.totalorder %s19, 1
      %p37 = por %p35, %p36
      %p38 = scmp.ne.s32.totalorder %s27, %s28
      %p39 = scmp.eq.s32.totalorder %s19, 0
      %p40 = por %p38, %p39
      %p41 = scmp.ne.s32.totalorder %s27, %s28
      %p42 = scmp.eq.s32.totalorder %s20, 1
      %p43 = por %p41, %p42
      %p45 = scmp.ne.s32.totalorder %s28, %s44
      %p46 = scmp.eq.s32.totalorder %s20, 0
      %p47 = por %p45, %p46
      %s49 = sadd.s32 %s48, 1
      %p52 = scmp.eq.s32.totalorder %s14, 1
      %p53 = scmp.ne.s32.totalorder %s48, %s50
      %p54 = scmp.eq.s32.totalorder %s14, 0
      %p55 = por %p53, %p54
      %p56 = scmp.ne.s32.totalorder %s48, %s50
      %p57 = scmp.eq.s32.totalorder %s19, 1
      %p58 = por %p56, %p57
      %p59 = scmp.ne.s32.totalorder %s50, %s51
      %p60 = scmp.eq.s32.totalorder %s19, 0
      %p61 = por %p59, %p60
      %p62 = scmp.ne.s32.totalorder %s50, %s51
      %p63 = scmp.eq.s32.totalorder %s20, 1
      %p64 = por %p62, %p63
      %p66 = scmp.ne.s32.totalorder %s51, %s65
      %p67 = scmp.eq.s32.totalorder %s20, 0
      %p68 = por %p66, %p67
      %s70 = sadd.s32 %s69, 1
      %p73 = scmp.eq.s32.totalorder %s14, 1
      %p74 = scmp.ne.s32.totalorder %s69, %s71
      %p75 = scmp.eq.s32.totalorder %s14, 0
      %p76 = por %p74, %p75
      %p77 = scmp.ne.s32.totalorder %s69, %s71
      %p78 = scmp.eq.s32.totalorder %s19, 1
      %p79 = por %p77, %p78
      %p80 = scmp.ne.s32.totalorder %s71, %s72
      %p81 = scmp.eq.s32.totalorder %s19, 0
      %p82 = por %p80, %p81
      %p83 = scmp.ne.s32.totalorder %s71, %s72
      %p84 = scmp.eq.s32.totalorder %s20, 1
      %p85 = por %p83, %p84
      %p87 = scmp.ne.s32.totalorder %s72, %s86
      %p88 = scmp.eq.s32.totalorder %s20, 0
      %p89 = por %p87, %p88
      %s91 = sadd.s32 %s90, 1
      %p94 = scmp.eq.s32.totalorder %s14, 1
      %p95 = scmp.ne.s32.totalorder %s90, %s92
      %p96 = scmp.eq.s32.totalorder %s14, 0
      %p97 = por %p95, %p96
      %p98 = scmp.ne.s32.totalorder %s90, %s92
      %p99 = scmp.eq.s32.totalorder %s19, 1
      %p100 = por %p98, %p99
      %p101 = scmp.ne.s32.totalorder %s92, %s93
      %p102 = scmp.eq.s32.totalorder %s19, 0
      %p103 = por %p101, %p102
      %p104 = scmp.ne.s32.totalorder %s92, %s93
      %p105 = scmp.eq.s32.totalorder %s20, 1
      %p106 = por %p104, %p105
      %p108 = scmp.ne.s32.totalorder %s93, %s107
      %p109 = scmp.eq.s32.totalorder %s20, 0
      %p110 = por %p108, %p109
      %s112 = sadd.s32 %s111, 1
      %p115 = scmp.eq.s32.totalorder %s14, 1
      %p116 = scmp.ne.s32.totalorder %s111, %s113
      %p117 = scmp.eq.s32.totalorder %s14, 0
      %p118 = por %p116, %p117
      %p119 = scmp.ne.s32.totalorder %s111, %s113
      %p120 = scmp.eq.s32.totalorder %s19, 1
      %p121 = por %p119, %p120
      %p122 = scmp.ne.s32.totalorder %s113, %s114
      %p123 = scmp.eq.s32.totalorder %s19, 0
      %p124 = por %p122, %p123
      %p125 = scmp.ne.s32.totalorder %s113, %s114
      %p126 = scmp.eq.s32.totalorder %s20, 1
      %p127 = por %p125, %p126
      %p129 = scmp.ne.s32.totalorder %s114, %s128
      %p130 = scmp.eq.s32.totalorder %s20, 0
      %p131 = por %p129, %p130
      %s132 = ssub.s32 %s14, %s21
      %p133 = scmp.eq.s32.totalorder %s132, 0
      %s135 = sadd.s32 %s134, 1
      %s136 = scalar_select %p133, %s134, %s135
      %p139 = pneg %p133
      %p140 = scmp.eq.s32.totalorder %s14, 1
      %p141 = por %p139, %p140
      %p142 = scmp.ne.s32.totalorder %s134, %s137
      %p143 = scmp.eq.s32.totalorder %s14, 0
      %p144 = por %p142, %p143
      %p145 = scmp.ne.s32.totalorder %s134, %s137
      %p146 = scmp.eq.s32.totalorder %s19, 1
      %p147 = por %p145, %p146
      %p148 = scmp.ne.s32.totalorder %s137, %s138
      %p149 = scmp.eq.s32.totalorder %s19, 0
      %p150 = por %p148, %p149
      %p151 = scmp.ne.s32.totalorder %s137, %s138
      %p152 = scmp.eq.s32.totalorder %s20, 1
      %p153 = por %p151, %p152
      %p155 = scmp.ne.s32.totalorder %s138, %s154
      %p156 = scmp.eq.s32.totalorder %s20, 0
      %p157 = por %p155, %p156
      %p158 = scmp.le.s32.totalorder 1, %s14
      %p159 = scmp.lt.s32.totalorder %s14, 3
      %p160 = pnand %p158, %p159
      %p161 = pneg %p160
      // Predicated region
      $region9: #{tpu_custom_call.1} parent=5 // pred_check
        _
      $region10: #{tpu_custom_call.1} parent=5 // pred_check_branch
        %163 = sbr.rel (%p160) target = $region12
      $region11: #{tpu_custom_call.1} parent=5 // pred_region
        %s164 = ssub.s32 %s14, 1
        // Predicated region
        $region13: #{tpu_custom_call.1} parent=11 // pred_check
          %p165 = pneg %p61
        $region14: #{tpu_custom_call.1} parent=11 // pred_check_branch
          %167 = sbr.rel (%p165) target = $region16
        $region15: #{tpu_custom_call.1} parent=11 // pred_region
          _
        $region16: #{tpu_custom_call.1} parent=11 // pred_fallthru
          _
        // Predicated region
        $region17: #{tpu_custom_call.1} parent=11 // pred_check
          %p168 = pneg %p82
        $region18: #{tpu_custom_call.1} parent=11 // pred_check_branch
          %170 = sbr.rel (%p168) target = $region20
        $region19: #{tpu_custom_call.1} parent=11 // pred_region
          _
        $region20: #{tpu_custom_call.1} parent=11 // pred_fallthru
          _
        // Predicated region
        $region21: #{tpu_custom_call.1} parent=11 // pred_check
          %p171 = pneg %p103
        $region22: #{tpu_custom_call.1} parent=11 // pred_check_branch
          %173 = sbr.rel (%p171) target = $region24
        $region23: #{tpu_custom_call.1} parent=11 // pred_region
          _
        $region24: #{tpu_custom_call.1} parent=11 // pred_fallthru
          _
        // Predicated region
        $region25: #{tpu_custom_call.1} parent=11 // pred_check
          %p174 = pneg %p124
        $region26: #{tpu_custom_call.1} parent=11 // pred_check_branch
          %176 = sbr.rel (%p174) target = $region28
        $region27: #{tpu_custom_call.1} parent=11 // pred_region
          _
        $region28: #{tpu_custom_call.1} parent=11 // pred_fallthru
          _
      $region12: #{tpu_custom_call.1} parent=5 // pred_fallthru
        _
      %p177 = scmp.lt.s32.totalorder %s14, 2
      // Predicated region
      $region29: #{tpu_custom_call.1} parent=5 // pred_check
        %p178 = pneg %p177
      $region30: #{tpu_custom_call.1} parent=5 // pred_check_branch
        %180 = sbr.rel (%p178) target = $region32
      $region31: #{tpu_custom_call.1} parent=5 // pred_region
        // Predicated region
        $region33: #{tpu_custom_call.1} parent=31 // pred_check
          %p181 = pneg %p34
        $region34: #{tpu_custom_call.1} parent=31 // pred_check_branch
          %183 = sbr.rel (%p181) target = $region36
        $region35: #{tpu_custom_call.1} parent=31 // pred_region
          %p184 = scmp.lt.s32.totalorder %s14, 1
          %s185 = scalar_select %p184, %s14, 1
          %s186 = smul.addr %s185, 8
          %s187 = scalar_lea.vmem %s0, %s186
        $region36: #{tpu_custom_call.1} parent=31 // pred_fallthru
          _
      $region32: #{tpu_custom_call.1} parent=5 // pred_fallthru
        _
      %p188 = scmp.le.s32.totalorder 1, %s14
      %p189 = scmp.lt.s32.totalorder %s14, 3
      %p190 = pnand %p188, %p189
      %p191 = pneg %p190
      // Predicated region
      $region37: #{tpu_custom_call.1} parent=5 // pred_check
        _
      $region38: #{tpu_custom_call.1} parent=5 // pred_check_branch
        %193 = sbr.rel (%p190) target = $region40
      $region39: #{tpu_custom_call.1} parent=5 // pred_region
        %s194 = ssub.s32 %s14, 1
        %p195 = scmp.lt.s32.totalorder %s19, 1
        %s196 = scalar_select %p195, %s19, 1
        %s197 = smul.addr %s196, 8
        %s198 = scalar_lea.vmem %s0, %s197
        %p199 = pneg %p40
        %p200 = pneg %p37
        %p201 = pneg %p61
        %p202 = pneg %p58
        %p203 = pneg %p82
        %p204 = pneg %p79
        %p205 = pneg %p103
        %p206 = pneg %p100
        %p207 = pneg %p124
        %p208 = pneg %p121
        %p209 = pneg %p150
        %p210 = pneg %p147
        %s211 = sand.u32 %s137, 1
        %s212 = scalar_lea.sflag [#allocation3], %s211
        %s213 = sand.u32 %s137, 1
        %s214 = smul.addr %s213, 8
        %s215 = scalar_lea.vmem [#allocation2], %s214
        %p216 = scmp.lt.s32.totalorder %s19, 1
        %s217 = scalar_select %p216, %s19, 1
        %s218 = smul.addr %s217, 8
        %s219 = scalar_lea.vmem %s0, %s218
        %v220 = vld [vmem:[%s219] sm:$0xff]
        %v221 = vld [vmem:[%s1] sm:$0xff]
        %v222 = vld [vmem:[%s1 + $0x8] sm:$0xff]
        %v223 = vld [vmem:[%s1 + $0x10] sm:$0xff]
        %v224 = vld [vmem:[%s1 + $0x18] sm:$0xff]
        %v225 = vld [vmem:[%s1 + $0x20] sm:$0xff]
        %v226 = vld [vmem:[%s1 + $0x28] sm:$0xff]
        %v227 = vld [vmem:[%s1 + $0x30] sm:$0xff]
        %v228 = vld [vmem:[%s1 + $0x38] sm:$0xff]
        %v229 = vld [vmem:[%s2] sm:$0x1]
        %v231 = vlaneseq
        %v232 = vshrl.u32 %v231, 7
        %v233 = vsub.s32 0, %v232
        %v234 = vrot.slane %v229, %v233
        %vm236 = vcmask 523264
        %v238 = vsel %vm236, %v220, 0
        %240 = vmatprep.subr.mxu0 0.0
        %241 = vmatpush1.msra.mxu0 %v221
        %242 = vmatprep.subr.mxu0 0.0
        %243 = vmatpush1.msra.mxu0 %v222
        %244 = vmatprep.subr.mxu0 0.0
        %245 = vmatpush1.msra.mxu0 %v223
        %246 = vmatprep.subr.mxu0 0.0
        %247 = vmatpush1.msra.mxu0 %v224
        %248 = vmatprep.subr.mxu0 0.0
        %249 = vmatpush1.msra.mxu0 %v225
        %250 = vmatprep.subr.mxu0 0.0
        %251 = vmatpush1.msra.mxu0 %v226
        %252 = vmatprep.subr.mxu0 0.0
        %253 = vmatpush1.msra.mxu0 %v227
        %254 = vmatprep.subr.mxu0 0.0
        %255 = vmatpush1.msra.mxu0 %v228
        %256 = vmatprep.subr.mxu0 0.0
        %257 = vmatpush1.msra.mxu0 0.0
        %258 = vmatprep.subr.mxu0 0.0
        %259 = vmatpush1.msra.mxu0 0.0
        %260 = vmatprep.subr.mxu0 0.0
        %261 = vmatpush1.msra.mxu0 0.0
        %262 = vmatprep.subr.mxu0 0.0
        %263 = vmatpush1.msra.mxu0 0.0
        %264 = vmatprep.subr.mxu0 0.0
        %265 = vmatpush1.msra.mxu0 0.0
        %266 = vmatprep.subr.mxu0 0.0
        %267 = vmatpush1.msra.mxu0 0.0
        %268 = vmatprep.subr.mxu0 0.0
        %269 = vmatpush1.msra.mxu0 0.0
        %270 = vmatprep.subr.mxu0 0.0
        %271 = vmatpush1.msra.mxu0 0.0
        %272 = vmatprep.subr.mxu0 0.0
        %273 = vmatpush1.msra.mxu0 0.0
        %274 = vmatprep.subr.mxu0 0.0
        %275 = vmatpush1.msra.mxu0 0.0
        %276 = vmatprep.subr.mxu0 0.0
        %277 = vmatpush1.msra.mxu0 0.0
        %278 = vmatprep.subr.mxu0 0.0
        %279 = vmatpush1.msra.mxu0 0.0
        %280 = vmatprep.subr.mxu0 0.0
        %281 = vmatpush1.msra.mxu0 0.0
        %282 = vmatprep.subr.mxu0 0.0
        %283 = vmatpush1.msra.mxu0 0.0
        %284 = vmatprep.subr.mxu0 0.0
        %285 = vmatpush1.msra.mxu0 0.0
        %286 = vmatprep.subr.mxu0 0.0
        %287 = vmatpush1.msra.mxu0 0.0
        %288 = vmatprep.subr.mxu0 0.0
        %289 = vmatpush1.msra.mxu0 0.0
        %290 = vmatprep.subr.mxu0 0.0
        %291 = vmatpush1.msra.mxu0 0.0
        %292 = vmatprep.subr.mxu0 0.0
        %293 = vmatpush1.msra.mxu0 0.0
        %294 = vmatprep.subr.mxu0 0.0
        %295 = vmatpush1.msra.mxu0 0.0
        %296 = vmatprep.subr.mxu0 0.0
        %297 = vmatpush1.msra.mxu0 0.0
        %298 = vmatprep.subr.mxu0 0.0
        %299 = vmatpush1.msra.mxu0 0.0
        %300 = vmatprep.subr.mxu0 0.0
        %301 = vmatpush1.msra.mxu0 0.0
        %302 = vmatprep.subr.mxu0 0.0
        %303 = vmatpush1.msra.mxu0 0.0
        %304 = vmatprep.mubr.f32.mxu0 0.0
        %305 = vmatmul.mubr.f32.gmra.mrb[0].mxu0 %v238
        %v306 = vpop.f32.mrb[0].mxu0
        %v307 = vadd.f32 %v234, %v306
        %v308 = vpop.f32.mrb[0].mxu0
        %309 = vdwg.mxu0
        %v310 = vmax.f32 %v307, 0.0
        %v311 = vld [vmem:[%s3] sm:$0xff]
        %v312 = vld [vmem:[%s3 + $0x8] sm:$0xff]
        %v313 = vld [vmem:[%s4] sm:$0x1]
        %v315 = vlaneseq
        %v316 = vshrl.u32 %v315, 7
        %v317 = vsub.s32 0, %v316
        %v318 = vrot.slane %v313, %v317
        %vm320 = vcmask 130048
        %v322 = vsel %vm320, %v310, 0
        %324 = vmatprep.subr.mxu0 0.0
        %325 = vmatpush1.msra.mxu0 %v311
        %326 = vmatprep.subr.mxu0 0.0
        %327 = vmatpush1.msra.mxu0 %v312
        %328 = vmatprep.subr.mxu0 0.0
        %329 = vmatpush1.msra.mxu0 0.0
        %330 = vmatprep.subr.mxu0 0.0
        %331 = vmatpush1.msra.mxu0 0.0
        %332 = vmatprep.subr.mxu0 0.0
        %333 = vmatpush1.msra.mxu0 0.0
        %334 = vmatprep.subr.mxu0 0.0
        %335 = vmatpush1.msra.mxu0 0.0
        %336 = vmatprep.subr.mxu0 0.0
        %337 = vmatpush1.msra.mxu0 0.0
        %338 = vmatprep.subr.mxu0 0.0
        %339 = vmatpush1.msra.mxu0 0.0
        %340 = vmatprep.subr.mxu0 0.0
        %341 = vmatpush1.msra.mxu0 0.0
        %342 = vmatprep.subr.mxu0 0.0
        %343 = vmatpush1.msra.mxu0 0.0
        %344 = vmatprep.subr.mxu0 0.0
        %345 = vmatpush1.msra.mxu0 0.0
        %346 = vmatprep.subr.mxu0 0.0
        %347 = vmatpush1.msra.mxu0 0.0
        %348 = vmatprep.subr.mxu0 0.0
        %349 = vmatpush1.msra.mxu0 0.0
        %350 = vmatprep.subr.mxu0 0.0
        %351 = vmatpush1.msra.mxu0 0.0
        %352 = vmatprep.subr.mxu0 0.0
        %353 = vmatpush1.msra.mxu0 0.0
        %354 = vmatprep.subr.mxu0 0.0
        %355 = vmatpush1.msra.mxu0 0.0
        %356 = vmatprep.subr.mxu0 0.0
        %357 = vmatpush1.msra.mxu0 0.0
        %358 = vmatprep.subr.mxu0 0.0
        %359 = vmatpush1.msra.mxu0 0.0
        %360 = vmatprep.subr.mxu0 0.0
        %361 = vmatpush1.msra.mxu0 0.0
        %362 = vmatprep.subr.mxu0 0.0
        %363 = vmatpush1.msra.mxu0 0.0
        %364 = vmatprep.subr.mxu0 0.0
        %365 = vmatpush1.msra.mxu0 0.0
        %366 = vmatprep.subr.mxu0 0.0
        %367 = vmatpush1.msra.mxu0 0.0
        %368 = vmatprep.subr.mxu0 0.0
        %369 = vmatpush1.msra.mxu0 0.0
        %370 = vmatprep.subr.mxu0 0.0
        %371 = vmatpush1.msra.mxu0 0.0
        %372 = vmatprep.subr.mxu0 0.0
        %373 = vmatpush1.msra.mxu0 0.0
        %374 = vmatprep.subr.mxu0 0.0
        %375 = vmatpush1.msra.mxu0 0.0
        %376 = vmatprep.subr.mxu0 0.0
        %377 = vmatpush1.msra.mxu0 0.0
        %378 = vmatprep.subr.mxu0 0.0
        %379 = vmatpush1.msra.mxu0 0.0
        %380 = vmatprep.subr.mxu0 0.0
        %381 = vmatpush1.msra.mxu0 0.0
        %382 = vmatprep.subr.mxu0 0.0
        %383 = vmatpush1.msra.mxu0 0.0
        %384 = vmatprep.subr.mxu0 0.0
        %385 = vmatpush1.msra.mxu0 0.0
        %386 = vmatprep.subr.mxu0 0.0
        %387 = vmatpush1.msra.mxu0 0.0
        %388 = vmatprep.mubr.f32.mxu0 0.0
        %389 = vmatmul.mubr.f32.gmra.mrb[0].mxu0 %v322
        %v390 = vpop.f32.mrb[0].mxu0
        %v391 = vadd.f32 %v318, %v390
        %v392 = vpop.f32.mrb[0].mxu0
        %393 = vdwg.mxu0
        %v394 = vxor.u32 %v391, 2147483648
        %v395 = vmul.f32 %v394, 1.442695
        %v396 = vpow.pop %v395
        %v397 = vadd.f32 %v396, 1.0
        %v398 = vrcp.pop %v397
        %v399 = vmul.f32 1.0, %v398
        %v400 = vmul.f32 %v220, %v399
        %v401 = vadd.f32 %v400, %v220
        %402 = vst.msk [vmem:[%s215] sm:$0xff] %vm236, %v401
        %s403 = sand.u32 %s137, 1
        %s404 = scalar_lea.sflag [#allocation3], %s403
        %s405 = sand.u32 %s137, 1
        %s406 = smul.addr %s405, 8
        %s407 = scalar_lea.vmem [#allocation2], %s406
        // Predicated region
        $region41: #{tpu_custom_call.1} parent=39 // pred_check
          %p408 = pneg %p147
        $region42: #{tpu_custom_call.1} parent=39 // pred_check_branch
          %410 = sbr.rel (%p408) target = $region44
        $region43: #{tpu_custom_call.1} parent=39 // pred_region
          %s412 = ssub.s32 128, 128
          %413 = vsyncadd %s404, %s412
          %s414 = smul.addr %s19, 128
          %s415 = scalar_lea.hbm %s5, %s414
          %s417 = sshll.u32 %s407, 4
          %s418 = int_to_ptr.vmem [resolvable:$true] %s417
          %420 = dma.vmem_to_hbm [thread:$0]  %s418, 128, %s415, %s404
        $region44: #{tpu_custom_call.1} parent=39 // pred_fallthru
          _
      $region40: #{tpu_custom_call.1} parent=5 // pred_fallthru
        _
      %p421 = scmp.le.s32.totalorder 2, %s14
      // Predicated region
      $region45: #{tpu_custom_call.1} parent=5 // pred_check
        %p422 = pneg %p421
      $region46: #{tpu_custom_call.1} parent=5 // pred_check_branch
        %424 = sbr.rel (%p422) target = $region48
      $region47: #{tpu_custom_call.1} parent=5 // pred_region
        %s425 = ssub.s32 %s14, 2
        // Predicated region
        $region49: #{tpu_custom_call.1} parent=47 // pred_check
          %p426 = pneg %p153
        $region50: #{tpu_custom_call.1} parent=47 // pred_check_branch
          %428 = sbr.rel (%p426) target = $region52
        $region51: #{tpu_custom_call.1} parent=47 // pred_region
          %s429 = sand.u32 %s138, 1
          %s430 = scalar_lea.sflag [#allocation3], %s429
          %s431 = sand.u32 %s138, 1
          %s432 = smul.addr %s431, 8
          %s433 = scalar_lea.vmem [#allocation2], %s432
          %434 = dma.done %s430, 128
        $region52: #{tpu_custom_call.1} parent=47 // pred_fallthru
          _
      $region48: #{tpu_custom_call.1} parent=5 // pred_fallthru
        _
    $region6: #{tpu_custom_call.1} parent=1 // loop_footer
      %s18 = sadd.s32 1, %s14
    $region7: #{tpu_custom_call.1} parent=1 // loop_footer_branch
      %13 = sbr.rel target = $region3
    $region8: #{tpu_custom_call.1} parent=1 // loop_exit
      _
    %435 = vsyncpa [#allocation3], 1
    %s436 = scalar_lea.sflag [#allocation3], 1
    %437 = vsyncpa %s436, 1

</llo_original>
